<compile_context>
chip_gen: v7x
topology: tpu7x:2x2x1
jax: 0.10.0
libtpu: 0.0.40
codegen_flags: <defaults>
</compile_context>

<pallas_src>
import functools

import numpy as np

import jax
import jax.numpy as jnp
from jax.experimental import pallas as pl
from jax.experimental.pallas import tpu as pltpu

BN_EPS = 1e-5
_LANE = 128
_SUBLANE = 8
_MAX_TILE_N = 512                       # ~85% of HBM roofline at 512 lanes
_VMEM_LIMIT_BYTES = 48 * 1024 * 1024    # explicit scoped-VMEM request


def _round_up(x, m):
    return (x + m - 1) // m * m


def _choose_tile_n(n_padded):
    for cand in (_MAX_TILE_N, 256, _LANE):
        if cand <= n_padded and n_padded % cand == 0:
            return cand
    return _LANE


# ----------------------------------------------------------------------------
# Shared per-tile recompute:  wy = W @ ( s @ (W_theta @ v + b_theta) ) + b_W
# ----------------------------------------------------------------------------
def _wy_tile(v, wt, bt, s, ww, bw):
    f32 = jnp.float32
    th = jnp.dot(wt, v, preferred_element_type=f32) + bt       # (CP, TN)
    y_t = jnp.dot(s, th, preferred_element_type=f32)           # (CP, TN)
    return jnp.dot(ww, y_t, preferred_element_type=f32) + bw   # (DP, TN)


# ----------------------------------------------------------------------------
# Pass 1: per-batch attention matrix  s = (g @ ph^T) / N, accumulated over
#         lane-dense N-stripes (flash-style, no (N, N) intermediate).
# ----------------------------------------------------------------------------
def s_accum_kernel(v_ref, wgp_ref, bgp_ref, s_ref, s_acc, *, cp, n_valid, tile_n):
    t = pl.program_id(1)
    f32 = jnp.float32

    @pl.when(t == 0)
    def _():
        s_acc[...] = jnp.zeros_like(s_acc)

    v = v_ref[0]                                               # (DP, TN)
    # Stacked g|phi 1x1-conv projection: one MXU matmul, aligned (CP) slices.
    proj = jnp.dot(wgp_ref[...], v, preferred_element_type=f32) + bgp_ref[...]
    g = proj[:cp, :]                                           # (CP, TN)
    ph = proj[cp:2 * cp, :]                                    # (CP, TN)

    # Mask padded key columns so they do not contribute to s.
    col = t * tile_n + jax.lax.broadcasted_iota(jnp.int32, (1, tile_n), 1)
    mask = (col < n_valid).astype(f32)                         # (1, TN)

    s_acc[...] += jax.lax.dot_general(g * mask, ph, (((1,), (1,)), ((), ())),
                                      preferred_element_type=f32)

    @pl.when(t == pl.num_programs(1) - 1)
    def _():
        # Fold the 1/N scale into the tiny (CP, CP) matrix (true N, not padded).
        s_ref[0] = s_acc[...] * (1.0 / n_valid)


# ----------------------------------------------------------------------------
# Pass 2: per-(batch, N-tile) centred BatchNorm partial statistics.
#         Emits [masked column-sum, masked centred sum-of-squares] per channel.
# ----------------------------------------------------------------------------
def stats_kernel(v_ref, wt_ref, bt_ref, s_ref, ww_ref, bw_ref, stat_ref,
                 *, n_valid, tile_n):
    t = pl.program_id(1)
    f32 = jnp.float32
    wy = _wy_tile(v_ref[0], wt_ref[...], bt_ref[...], s_ref[0],
                  ww_ref[...], bw_ref[...])                    # (DP, TN)

    col = t * tile_n + jax.lax.broadcasted_iota(jnp.int32, (1, tile_n), 1)
    mask = (col < n_valid).astype(f32)                         # (1, TN)
    cnt = jnp.clip(n_valid - t * tile_n, 1, tile_n).astype(f32)

    wsum = jnp.sum(wy * mask, axis=1, keepdims=True)           # (DP, 1)
    centred = (wy - wsum * (1.0 / cnt)) * mask
    m2 = jnp.sum(centred * centred, axis=1, keepdims=True)     # (DP, 1)
    stat_ref[0, 0] = jnp.concatenate([wsum, m2], axis=1)       # (DP, 2), one store


# ----------------------------------------------------------------------------
# Pass 3: recompute wy per tile, fused BatchNorm (precomputed scale/shift)
#         + residual.  Lane-dense output, no wy array in HBM at all.
# ----------------------------------------------------------------------------
def bn_residual_kernel(v_ref, wt_ref, bt_ref, s_ref, ww_ref, bw_ref,
                       scale_ref, shift_ref, out_ref):
    v = v_ref[0]                                               # (DP, TN)
    wy = _wy_tile(v, wt_ref[...], bt_ref[...], s_ref[0],
                  ww_ref[...], bw_ref[...])
    out_ref[0] = wy * scale_ref[...] + shift_ref[...] + v


def _compiler_params(semantics):
    return pltpu.CompilerParams(dimension_semantics=semantics,
                                vmem_limit_bytes=_VMEM_LIMIT_BYTES)


# ----------------------------------------------------------------------------
# One-time parameter preparation (hoisted out of the per-call forward).
# ----------------------------------------------------------------------------
def rs_gcn_prepare(params, in_channels, n):
    wg, bg, wt, bt, wp, bp, ww, bw, gamma, beta = params
    c = wg.shape[0]
    d = in_channels
    cp = _round_up(c, _SUBLANE)           # aligned projection sections
    dp = _round_up(d, _SUBLANE)
    n_pad = _round_up(n, _LANE)           # lane-dense N
    tile_n = _choose_tile_n(n_pad)

    def pad2(w, rows, cols):
        return jnp.pad(w, ((0, rows - w.shape[0]), (0, cols - w.shape[1])))

    def pad_col(b_, rows):
        return jnp.pad(b_, (0, rows - b_.shape[0]))[:, None]

    return dict(
        d=d, c=c, n=n, dp=dp, cp=cp, n_pad=n_pad, tile_n=tile_n,
        # g & phi stacked for pass 1 (one MXU matmul instead of two).
        w_gp=jnp.concatenate([pad2(wg, cp, dp), pad2(wp, cp, dp)], axis=0),
        b_gp=jnp.concatenate([pad_col(bg, cp), pad_col(bp, cp)], axis=0),
        w_t=pad2(wt, cp, dp), b_t=pad_col(bt, cp),
        w_w=pad2(ww, dp, cp), b_w=pad_col(bw, dp),
        gamma=gamma, beta=beta,
    )


# ----------------------------------------------------------------------------
# Full module forward.
# ----------------------------------------------------------------------------
def rs_gcn_forward(v, prep):
    b, d, n = v.shape
    dp, cp = prep["dp"], prep["cp"]
    n_pad, tile_n = prep["n_pad"], prep["tile_n"]
    nt = n_pad // tile_n

    # TODO(synk): at real shapes fold this pad into the producer of v.
    v_p = jnp.pad(v, ((0, 0), (0, dp - d), (0, n_pad - n)))

    const = lambda shape: pl.BlockSpec(shape, lambda bi, ti: (0, 0))
    v_spec = pl.BlockSpec((1, dp, tile_n), lambda bi, ti: (bi, 0, ti))
    s_spec = pl.BlockSpec((1, cp, cp), lambda bi, ti: (bi, 0, 0))

    # -- pass 1: s = (g @ ph^T) / N, reduced over N-stripes ------------------
    s = pl.pallas_call(
        functools.partial(s_accum_kernel, cp=cp, n_valid=n, tile_n=tile_n),
        out_shape=jax.ShapeDtypeStruct((b, cp, cp), jnp.float32),
        grid=(b, nt),
        in_specs=[v_spec, const((2 * cp, dp)), const((2 * cp, 1))],
        out_specs=s_spec,
        scratch_shapes=[pltpu.VMEM((cp, cp), jnp.float32)],
        compiler_params=_compiler_params(("parallel", "arbitrary")),
    )(v_p, prep["w_gp"], prep["b_gp"])

    # -- pass 2: centred BN partial statistics per (batch, N-tile) -----------
    stats = pl.pallas_call(
        functools.partial(stats_kernel, n_valid=n, tile_n=tile_n),
        out_shape=jax.ShapeDtypeStruct((b, nt, dp, 2), jnp.float32),
        grid=(b, nt),
        in_specs=[v_spec, const((cp, dp)), const((cp, 1)), s_spec,
                  const((dp, cp)), const((dp, 1))],
        out_specs=pl.BlockSpec((1, 1, dp, 2), lambda bi, ti: (bi, ti, 0, 0)),
        compiler_params=_compiler_params(("parallel", "parallel")),
    )(v_p, prep["w_t"], prep["b_t"], s, prep["w_w"], prep["b_w"])

    # -- tiny XLA glue: Chan parallel-variance combine -> BN scale / shift ---
    sums = stats[..., 0]                                       # (B, NT, DP)
    m2s = stats[..., 1]                                        # (B, NT, DP)
    counts = jnp.asarray(np.clip(n - np.arange(nt) * tile_n, 0, tile_n),
                         jnp.float32)                          # (NT,), static
    total = float(b * n)
    mean = jnp.sum(sums, axis=(0, 1)) / total                  # (DP,)
    tile_mean = sums / jnp.maximum(counts, 1.0)[None, :, None]
    m2 = (jnp.sum(m2s, axis=(0, 1))
          + jnp.sum(counts[None, :, None] * (tile_mean - mean) ** 2,
                    axis=(0, 1)))
    var = m2 / total                                           # biased (BN training mode)
    inv_std = jax.lax.rsqrt(var[:d] + BN_EPS)
    scale_d = prep["gamma"] * inv_std
    shift_d = prep["beta"] - mean[:d] * scale_d
    scale = jnp.zeros((dp, 1), jnp.float32).at[:d, 0].set(scale_d)
    shift = jnp.zeros((dp, 1), jnp.float32).at[:d, 0].set(shift_d)

    # -- pass 3: recompute wy per tile, fused BN + residual, lane-dense out --
    out_p = pl.pallas_call(
        bn_residual_kernel,
        out_shape=jax.ShapeDtypeStruct((b, dp, n_pad), jnp.float32),
        grid=(b, nt),
        in_specs=[v_spec, const((cp, dp)), const((cp, 1)), s_spec,
                  const((dp, cp)), const((dp, 1)), const((dp, 1)),
                  const((dp, 1))],
        out_specs=v_spec,
        compiler_params=_compiler_params(("parallel", "parallel")),
    )(v_p, prep["w_t"], prep["b_t"], s, prep["w_w"], prep["b_w"], scale, shift)

    return out_p[:, :d, :n]


# ----------------------------------------------------------------------------
# Pure-JAX reference (faithful to the PyTorch module, high-precision matmuls,
# two-pass BatchNorm variance).
# ----------------------------------------------------------------------------
def rs_gcn_reference(v, params):
    wg, bg, wt, bt, wp, bp, ww, bw, gamma, beta = params
    n = v.shape[-1]
    hi = jax.lax.Precision.HIGHEST
    g_v = jnp.einsum('cd,bdn->bcn', wg, v, precision=hi) + bg[None, :, None]
    th_v = jnp.einsum('cd,bdn->bcn', wt, v, precision=hi) + bt[None, :, None]
    ph_v = jnp.einsum('cd,bdn->bcn', wp, v, precision=hi) + bp[None, :, None]
    r = jnp.einsum('bcn,bcm->bnm', th_v, ph_v, precision=hi) / n    # (B,N,N)
    y = jnp.einsum('bnm,bcm->bcn', r, g_v, precision=hi)            # (B,C,N)
    wy = jnp.einsum('dc,bcn->bdn', ww, y, precision=hi) + bw[None, :, None]
    mean = jnp.mean(wy, axis=(0, 2), keepdims=True)
    var = jnp.mean((wy - mean) ** 2, axis=(0, 2), keepdims=True)
    bn = (wy - mean) * jax.lax.rsqrt(var + BN_EPS)
    bn = bn * gamma[None, :, None] + beta[None, :, None]
    return bn + v


if __name__ == "__main__":
    B, D, N = 2, 20, 30            # batch, in_channels, sequence length
    C = D // 2                     # inter_channels (module default behaviour)

    key = jax.random.PRNGKey(0)
    ks = jax.random.split(key, 7)

    def conv_init(k, out_c, in_c):
        # Matches PyTorch Conv1d default init scale (kaiming-uniform, k=1).
        kw, kb = jax.random.split(k)
        bound = 1.0 / float(np.sqrt(in_c))
        w = jax.random.uniform(kw, (out_c, in_c), jnp.float32, -bound, bound)
        b_ = jax.random.uniform(kb, (out_c,), jnp.float32, -bound, bound)
        return w, b_

    v = jax.random.normal(ks[0], (B, D, N), dtype=jnp.float32)
    wg, bg = conv_init(ks[1], C, D)
    wt, bt = conv_init(ks[2], C, D)
    wp, bp = conv_init(ks[3], C, D)
    ww, bw = conv_init(ks[4], D, C)
    # The PyTorch module zero-inits BN gamma/beta (making W_y == 0); random
    # gamma/beta exercise the full compute path with identical semantics.
    gamma = 1.0 + 0.1 * jax.random.normal(ks[5], (D,), dtype=jnp.float32)
    beta = 0.1 * jax.random.normal(ks[6], (D,), dtype=jnp.float32)

    params = (wg, bg, wt, bt, wp, bp, ww, bw, gamma, beta)

    prep = rs_gcn_prepare(params, D, N)   # hoisted out of the forward pass
    out = rs_gcn_forward(v, prep)
    out = jax.block_until_ready(out)

    ref = rs_gcn_reference(v, params)
    assert out.shape == (B, D, N)
    # Remaining differences vs the reference come only from matmul association
    # order and the (robust, centred) partial-stat BN reduction — typically
    # <= ~1e-5 here; 1e-3 keeps a wide margin while still catching real bugs.
    assert jnp.allclose(out, ref, rtol=1e-3, atol=1e-3), "mismatch vs reference"
    print("KERNEL_OK")
</pallas_src>

<mosaic_0001>
module attributes {stable_mosaic.version = 11 : i64} {
  func.func @s_accum_kernel(%arg0: i32, %arg1: i32, %arg2: memref<1x24x128xf32, #tpu.memory_space<vmem>>, %arg3: memref<32x24xf32, #tpu.memory_space<vmem>>, %arg4: memref<32x1xf32, #tpu.memory_space<vmem>>, %arg5: memref<1x16x16xf32, #tpu.memory_space<vmem>>, %arg6: memref<16x16xf32, #tpu.memory_space<vmem>>) attributes {dimension_semantics = [#tpu.dimension_semantics<parallel>, #tpu.dimension_semantics<arbitrary>], iteration_bounds = array<i64: 2, 1>, scalar_prefetch = 0 : i64, scratch_operands = 1 : i64, tpu.core_type = #tpu.core_type<tc>, window_params = [{transform_indices = @transform_0, window_bounds = array<i64: 1, 24, 128>}, {pipeline_mode = #tpu.pipeline_mode<synchronous>, transform_indices = @transform_1, window_bounds = array<i64: 32, 24>}, {pipeline_mode = #tpu.pipeline_mode<synchronous>, transform_indices = @transform_2, window_bounds = array<i64: 32, 1>}, {transform_indices = @transform_3, window_bounds = array<i64: 1, 16, 16>}]} {
    %c0_i32 = arith.constant 0 : i32
    %0 = arith.cmpi eq, %arg1, %c0_i32 : i32
    %1 = arith.extui %0 : i1 to i32
    %c0_i32_0 = arith.constant 0 : i32
    %2 = arith.cmpi ne, %1, %c0_i32_0 : i32
    scf.if %2 {
      %cst_14 = arith.constant 0.000000e+00 : f32
      %29 = vector.broadcast %cst_14 : f32 to vector<16x16xf32>
      %c0_15 = arith.constant 0 : index
      %c0_16 = arith.constant 0 : index
      %30 = vector.load %arg6[%c0_15, %c0_16] : memref<16x16xf32, #tpu.memory_space<vmem>>, vector<16x16xf32>
      tpu.vector_store %arg6[%c0_15, %c0_16], %29 {strides = array<i32>} : memref<16x16xf32, #tpu.memory_space<vmem>>, vector<16x16xf32>,
    } else {
    }
    %c0 = arith.constant 0 : index
    %c0_1 = arith.constant 0 : index
    %c0_2 = arith.constant 0 : index
    %3 = vector.load %arg2[%c0, %c0_1, %c0_2] : memref<1x24x128xf32, #tpu.memory_space<vmem>>, vector<1x24x128xf32>
    %4 = vector.shape_cast %3 : vector<1x24x128xf32> to vector<24x128xf32>
    %c0_3 = arith.constant 0 : index
    %c0_4 = arith.constant 0 : index
    %5 = vector.load %arg3[%c0_3, %c0_4] : memref<32x24xf32, #tpu.memory_space<vmem>>, vector<32x24xf32>
    %cst = arith.constant dense<0.000000e+00> : vector<32x128xf32>
    %6 = tpu.matmul %5, %4, %cst {dimension_numbers = #tpu.dot_dimension_numbers<[1], [0], [0], [1], [0, 0, 1, 1], [], []>} : vector<32x24xf32>, vector<24x128xf32>, vector<32x128xf32> -> vector<32x128xf32>
    %c0_5 = arith.constant 0 : index
    %c0_6 = arith.constant 0 : index
    %7 = vector.load %arg4[%c0_5, %c0_6] : memref<32x1xf32, #tpu.memory_space<vmem>>, vector<32x1xf32>
    %8 = vector.broadcast %7 : vector<32x1xf32> to vector<32x128xf32>
    %9 = arith.addf %6, %8 : vector<32x128xf32>
    %10 = vector.extract_strided_slice %9 {offsets = [0, 0], sizes = [16, 128], strides = [1, 1]} : vector<32x128xf32> to vector<16x128xf32>
    %11 = vector.extract_strided_slice %9 {offsets = [16, 0], sizes = [16, 128], strides = [1, 1]} : vector<32x128xf32> to vector<16x128xf32>
    %c128_i32 = arith.constant 128 : i32
    %12 = arith.muli %arg1, %c128_i32 : i32
    %13 = tpu.iota {dimensions = array<i32: 1>} : vector<1x128xi32>
    %14 = vector.broadcast %12 : i32 to vector<1x128xi32>
    %15 = arith.addi %14, %13 : vector<1x128xi32>
    %c30_i32 = arith.constant 30 : i32
    %16 = vector.broadcast %c30_i32 : i32 to vector<1x128xi32>
    %17 = arith.cmpi slt, %15, %16 : vector<1x128xi32>
    %18 = arith.extui %17 : vector<1x128xi1> to vector<1x128xi32>
    %19 = arith.sitofp %18 : vector<1x128xi32> to vector<1x128xf32>
    %c0_7 = arith.constant 0 : index
    %c0_8 = arith.constant 0 : index
    %20 = vector.load %arg6[%c0_7, %c0_8] : memref<16x16xf32, #tpu.memory_space<vmem>>, vector<16x16xf32>
    %21 = vector.broadcast %19 : vector<1x128xf32> to vector<16x128xf32>
    %22 = arith.mulf %10, %21 : vector<16x128xf32>
    %cst_9 = arith.constant dense<0.000000e+00> : vector<16x16xf32>
    %23 = tpu.matmul %22, %11, %cst_9 {dimension_numbers = #tpu.dot_dimension_numbers<[1], [1], [0], [0], [0, 0, 1, 0], [], []>} : vector<16x128xf32>, vector<16x128xf32>, vector<16x16xf32> -> vector<16x16xf32>
    %24 = arith.addf %20, %23 : vector<16x16xf32>
    %c0_10 = arith.constant 0 : index
    %c0_11 = arith.constant 0 : index
    %25 = vector.load %arg6[%c0_10, %c0_11] : memref<16x16xf32, #tpu.memory_space<vmem>>, vector<16x16xf32>
    tpu.vector_store %arg6[%c0_10, %c0_11], %24 {strides = array<i32>} : memref<16x16xf32, #tpu.memory_space<vmem>>, vector<16x16xf32>,
    %c0_i32_12 = arith.constant 0 : i32
    %26 = arith.cmpi eq, %arg1, %c0_i32_12 : i32
    %27 = arith.extui %26 : i1 to i32
    %c0_i32_13 = arith.constant 0 : i32
    %28 = arith.cmpi ne, %27, %c0_i32_13 : i32
    scf.if %28 {
      %c0_14 = arith.constant 0 : index
      %c0_15 = arith.constant 0 : index
      %29 = vector.load %arg6[%c0_14, %c0_15] : memref<16x16xf32, #tpu.memory_space<vmem>>, vector<16x16xf32>
      %cst_16 = arith.constant 0.0333333351 : f32
      %30 = vector.broadcast %cst_16 : f32 to vector<16x16xf32>
      %31 = arith.mulf %29, %30 : vector<16x16xf32>
      %c0_17 = arith.constant 0 : index
      %c0_18 = arith.constant 0 : index
      %c0_19 = arith.constant 0 : index
      %32 = vector.load %arg5[%c0_17, %c0_18, %c0_19] : memref<1x16x16xf32, #tpu.memory_space<vmem>>, vector<1x16x16xf32>
      %33 = vector.shape_cast %32 : vector<1x16x16xf32> to vector<16x16xf32>
      %34 = vector.shape_cast %31 : vector<16x16xf32> to vector<1x16x16xf32>
      tpu.vector_store %arg5[%c0_17, %c0_18, %c0_19], %34 {strides = array<i32>} : memref<1x16x16xf32, #tpu.memory_space<vmem>>, vector<1x16x16xf32>,
    } else {
    }
    return
  }
  func.func @transform_0(%arg0: i32, %arg1: i32) -> (i32, i32, i32) {
    %c0_i32 = arith.constant 0 : i32
    %c0_i32_0 = arith.constant 0 : i32
    return %arg0, %c0_i32, %arg1 : i32, i32, i32
  }
  func.func @transform_1(%arg0: i32, %arg1: i32) -> (i32, i32) {
    %c0_i32 = arith.constant 0 : i32
    %c0_i32_0 = arith.constant 0 : i32
    %c0_i32_1 = arith.constant 0 : i32
    return %c0_i32, %c0_i32_0 : i32, i32
  }
  func.func @transform_2(%arg0: i32, %arg1: i32) -> (i32, i32) {
    %c0_i32 = arith.constant 0 : i32
    %c0_i32_0 = arith.constant 0 : i32
    %c0_i32_1 = arith.constant 0 : i32
    return %c0_i32, %c0_i32_0 : i32, i32
  }
  func.func @transform_3(%arg0: i32, %arg1: i32) -> (i32, i32, i32) {
    %c0_i32 = arith.constant 0 : i32
    %c0_i32_0 = arith.constant 0 : i32
    %c0_i32_1 = arith.constant 0 : i32
    return %arg0, %c0_i32, %c0_i32_0 : i32, i32, i32
  }
}

</mosaic_0001>

<llo_original>
// kernel: tpu_custom_call.1
$region0: #{tpu_custom_call.1}
  #allocation0 [shape = 'u32[]', space=smem, size = 0x4, offset = 0x4, fixed_abs, tag = 'smem constant byte address 0x4 - core index']
  #allocation1 [shape = 'u32[144,128]{1,0:T(1,128)}', space=vmem, size = 0x12000, scoped, tag = 'internal scratch']
  #allocation2 [shape = 'f32[16,16]{1,0:T(8,128)}', space=vmem, size = 0x2000, scoped, tag = 'scratch operand']
  %s0 = inlined_call_operand.vmem [shape: f32[2,24,128], index: 0, kind: input, shape index: {}]
  %s1 = inlined_call_operand.vmem [shape: f32[32,24], index: 1, kind: input, shape index: {}]
  %s2 = inlined_call_operand.vmem [shape: f32[32,1], index: 2, kind: input, shape index: {}]
  %s3 = inlined_call_operand.hbm [shape: f32[2,16,16], index: 3, kind: output, shape index: {}]
  %s4 = sld [smem:[#allocation0]]
  $region53: #{tpu_custom_call.1} parent=0
    _
  %s6 = ssub.s32 1, %s4
  %s7 = scalar_select 0, %s6, %s4
  $region1: #{tpu_custom_call.1} parent=0
    #allocation3 [shape = 'u8[16384]{0}', space=vmem, size = 0x4000, scoped, tag = 'output window, operand 0']
    #allocation4 [shape = 's32[2]{0}', space=sflag, size = 0x8, scoped, tag = 'scoped memory for tpu_custom_call.1']
    %8 = vsyncpa [#allocation4], 0
    %s9 = scalar_lea.sflag [#allocation4], 1
    %10 = vsyncpa %s9, 0
    loop: start=0, step=1, limit=4
    $region2: #{tpu_custom_call.1} parent=1 // loop_pre_header
      _
    $region3: #{tpu_custom_call.1} parent=1 // loop_header
      %s12 = sphi 0, %s16
      %p13 = scmp.ge.s32.totalorder %s12, 4
      %s19 = sphi 0, %s31
      %s20 = sphi 0, %s27
      %s21 = sphi 0, %s19
      %s22 = sphi 0, %s20
      %s23 = sphi 0, %s21
      %s24 = sphi 0, %s22
      %s36 = sphi 0, %s38
      %s39 = sphi 0, %s36
      %s40 = sphi 0, %s39
      %s56 = sphi 0, %s40
      %s60 = sphi 0, %s60
      %s62 = sphi 0, %s60
      %s63 = sphi 0, %s62
      %s77 = sphi 0, %s63
      %s81 = sphi 0, %s81
      %s83 = sphi 0, %s81
      %s84 = sphi 0, %s83
      %s98 = sphi 0, %s84
      %s104 = sphi 0, %s106
      %s107 = sphi 0, %s104
      %s108 = sphi 0, %s107
      %s124 = sphi 0, %s108
    $region4: #{tpu_custom_call.1} parent=1 // loop_header_branch
      %15 = sbr.rel (%p13) target = $region8
    $region5: #{tpu_custom_call.1} parent=1 // loop_body
      %s17 = ssub.s32 %s12, 1
      %s18 = ssub.s32 %s12, 2
      %s25 = sadd.s32 1, %s20
      %p26 = scmp.ge.s32.totalorder %s25, 1
      %s27 = scalar_select %p26, 0, %s25
      %s28 = sadd.s32 1, %s19
      %s29 = scalar_select %p26, %s28, %s19
      %p30 = scmp.ge.s32.totalorder %s29, 2
      %s31 = scalar_select %p30, 0, %s29
      %s32 = ssub.s32 %s19, %s31
      %s33 = ssub.s32 %s20, %s27
      %s34 = sor.u32 %s32, %s33
      %p35 = scmp.eq.s32.totalorder %s34, 0
      %s37 = sadd.s32 %s36, 1
      %s38 = scalar_select %p35, %s36, %s37
      %p41 = pneg %p35
      %p42 = scmp.eq.s32.totalorder %s12, 1
      %p43 = por %p41, %p42
      %p44 = scmp.ne.s32.totalorder %s36, %s39
      %p45 = scmp.eq.s32.totalorder %s12, 0
      %p46 = por %p44, %p45
      %p47 = scmp.ne.s32.totalorder %s36, %s39
      %p48 = scmp.eq.s32.totalorder %s17, 1
      %p49 = por %p47, %p48
      %p50 = scmp.ne.s32.totalorder %s39, %s40
      %p51 = scmp.eq.s32.totalorder %s17, 0
      %p52 = por %p50, %p51
      %p53 = scmp.ne.s32.totalorder %s39, %s40
      %p54 = scmp.eq.s32.totalorder %s18, 1
      %p55 = por %p53, %p54
      %p57 = scmp.ne.s32.totalorder %s40, %s56
      %p58 = scmp.eq.s32.totalorder %s18, 0
      %p59 = por %p57, %p58
      %s61 = sadd.s32 %s60, 1
      %p64 = scmp.eq.s32.totalorder %s12, 1
      %p65 = scmp.ne.s32.totalorder %s60, %s62
      %p66 = scmp.eq.s32.totalorder %s12, 0
      %p67 = por %p65, %p66
      %p68 = scmp.ne.s32.totalorder %s60, %s62
      %p69 = scmp.eq.s32.totalorder %s17, 1
      %p70 = por %p68, %p69
      %p71 = scmp.ne.s32.totalorder %s62, %s63
      %p72 = scmp.eq.s32.totalorder %s17, 0
      %p73 = por %p71, %p72
      %p74 = scmp.ne.s32.totalorder %s62, %s63
      %p75 = scmp.eq.s32.totalorder %s18, 1
      %p76 = por %p74, %p75
      %p78 = scmp.ne.s32.totalorder %s63, %s77
      %p79 = scmp.eq.s32.totalorder %s18, 0
      %p80 = por %p78, %p79
      %s82 = sadd.s32 %s81, 1
      %p85 = scmp.eq.s32.totalorder %s12, 1
      %p86 = scmp.ne.s32.totalorder %s81, %s83
      %p87 = scmp.eq.s32.totalorder %s12, 0
      %p88 = por %p86, %p87
      %p89 = scmp.ne.s32.totalorder %s81, %s83
      %p90 = scmp.eq.s32.totalorder %s17, 1
      %p91 = por %p89, %p90
      %p92 = scmp.ne.s32.totalorder %s83, %s84
      %p93 = scmp.eq.s32.totalorder %s17, 0
      %p94 = por %p92, %p93
      %p95 = scmp.ne.s32.totalorder %s83, %s84
      %p96 = scmp.eq.s32.totalorder %s18, 1
      %p97 = por %p95, %p96
      %p99 = scmp.ne.s32.totalorder %s84, %s98
      %p100 = scmp.eq.s32.totalorder %s18, 0
      %p101 = por %p99, %p100
      %s102 = ssub.s32 %s19, %s31
      %p103 = scmp.eq.s32.totalorder %s102, 0
      %s105 = sadd.s32 %s104, 1
      %s106 = scalar_select %p103, %s104, %s105
      %p109 = pneg %p103
      %p110 = scmp.eq.s32.totalorder %s12, 1
      %p111 = por %p109, %p110
      %p112 = scmp.ne.s32.totalorder %s104, %s107
      %p113 = scmp.eq.s32.totalorder %s12, 0
      %p114 = por %p112, %p113
      %p115 = scmp.ne.s32.totalorder %s104, %s107
      %p116 = scmp.eq.s32.totalorder %s17, 1
      %p117 = por %p115, %p116
      %p118 = scmp.ne.s32.totalorder %s107, %s108
      %p119 = scmp.eq.s32.totalorder %s17, 0
      %p120 = por %p118, %p119
      %p121 = scmp.ne.s32.totalorder %s107, %s108
      %p122 = scmp.eq.s32.totalorder %s18, 1
      %p123 = por %p121, %p122
      %p125 = scmp.ne.s32.totalorder %s108, %s124
      %p126 = scmp.eq.s32.totalorder %s18, 0
      %p127 = por %p125, %p126
      %p128 = scmp.le.s32.totalorder 1, %s12
      %p129 = scmp.lt.s32.totalorder %s12, 3
      %p130 = pnand %p128, %p129
      %p131 = pneg %p130
      // Predicated region
      $region9: #{tpu_custom_call.1} parent=5 // pred_check
        _
      $region10: #{tpu_custom_call.1} parent=5 // pred_check_branch
        %133 = sbr.rel (%p130) target = $region12
      $region11: #{tpu_custom_call.1} parent=5 // pred_region
        %s134 = ssub.s32 %s12, 1
        // Predicated region
        $region13: #{tpu_custom_call.1} parent=11 // pred_check
          %p135 = pneg %p73
        $region14: #{tpu_custom_call.1} parent=11 // pred_check_branch
          %137 = sbr.rel (%p135) target = $region16
        $region15: #{tpu_custom_call.1} parent=11 // pred_region
          _
        $region16: #{tpu_custom_call.1} parent=11 // pred_fallthru
          _
        // Predicated region
        $region17: #{tpu_custom_call.1} parent=11 // pred_check
          %p138 = pneg %p94
        $region18: #{tpu_custom_call.1} parent=11 // pred_check_branch
          %140 = sbr.rel (%p138) target = $region20
        $region19: #{tpu_custom_call.1} parent=11 // pred_region
          _
        $region20: #{tpu_custom_call.1} parent=11 // pred_fallthru
          _
      $region12: #{tpu_custom_call.1} parent=5 // pred_fallthru
        _
      %p141 = scmp.lt.s32.totalorder %s12, 2
      // Predicated region
      $region21: #{tpu_custom_call.1} parent=5 // pred_check
        %p142 = pneg %p141
      $region22: #{tpu_custom_call.1} parent=5 // pred_check_branch
        %144 = sbr.rel (%p142) target = $region24
      $region23: #{tpu_custom_call.1} parent=5 // pred_region
        // Predicated region
        $region25: #{tpu_custom_call.1} parent=23 // pred_check
          %p145 = pneg %p46
        $region26: #{tpu_custom_call.1} parent=23 // pred_check_branch
          %147 = sbr.rel (%p145) target = $region28
        $region27: #{tpu_custom_call.1} parent=23 // pred_region
          %p148 = scmp.lt.s32.totalorder %s19, 1
          %s149 = scalar_select %p148, %s19, 1
          %p150 = scmp.lt.s32.totalorder %s20, 0
          %s151 = scalar_select %p150, %s20, 0
          %s152 = smul.addr %s149, 3
          %s153 = sadd.s32 %s151, %s152
          %s154 = smul.addr %s153, 8
          %s155 = scalar_lea.vmem %s0, %s154
        $region28: #{tpu_custom_call.1} parent=23 // pred_fallthru
          _
      $region24: #{tpu_custom_call.1} parent=5 // pred_fallthru
        _
      %p156 = scmp.le.s32.totalorder 1, %s12
      %p157 = scmp.lt.s32.totalorder %s12, 3
      %p158 = pnand %p156, %p157
      %p159 = pneg %p158
      // Predicated region
      $region29: #{tpu_custom_call.1} parent=5 // pred_check
        _
      $region30: #{tpu_custom_call.1} parent=5 // pred_check_branch
        %161 = sbr.rel (%p158) target = $region32
      $region31: #{tpu_custom_call.1} parent=5 // pred_region
        %s162 = ssub.s32 %s12, 1
        %p163 = scmp.lt.s32.totalorder %s21, 1
        %s164 = scalar_select %p163, %s21, 1
        %p165 = scmp.lt.s32.totalorder %s22, 0
        %s166 = scalar_select %p165, %s22, 0
        %s167 = smul.addr %s164, 3
        %s168 = sadd.s32 %s166, %s167
        %s169 = smul.addr %s168, 8
        %s170 = scalar_lea.vmem %s0, %s169
        %p171 = pneg %p52
        %p172 = pneg %p49
        %p173 = pneg %p73
        %p174 = pneg %p70
        %p175 = pneg %p94
        %p176 = pneg %p91
        %p177 = pneg %p120
        %p178 = pneg %p117
        %s179 = sand.u32 %s107, 1
        %s180 = scalar_lea.sflag [#allocation4], %s179
        %s181 = sand.u32 %s107, 1
        %s182 = smul.addr %s181, 16
        %s183 = scalar_lea.vmem [#allocation3], %s182
        %p184 = scmp.lt.s32.totalorder %s21, 1
        %s185 = scalar_select %p184, %s21, 1
        %p186 = scmp.lt.s32.totalorder %s22, 0
        %s187 = scalar_select %p186, %s22, 0
        %s188 = smul.addr %s185, 3
        %s189 = sadd.s32 %s187, %s188
        %s190 = smul.addr %s189, 8
        %s191 = scalar_lea.vmem %s0, %s190
        %p192 = scmp.eq.s32.totalorder %s22, 0
        // Predicated region
        $region33: #{tpu_custom_call.1} parent=31 // pred_check
          %p193 = pneg %p192
        $region34: #{tpu_custom_call.1} parent=31 // pred_check_branch
          %195 = sbr.rel (%p193) target = $region36
        $region35: #{tpu_custom_call.1} parent=31 // pred_region
          %vm196 = vcmask 130048
          %197 = vst.msk [vmem:[#allocation2] sm:$0xff] %vm196, 0.0
          %198 = vst.msk [vmem:[#allocation2 + $0x8] sm:$0xff] %vm196, 0.0
        $region36: #{tpu_custom_call.1} parent=31 // pred_fallthru
          _
        %v199 = vld [vmem:[%s191] sm:$0xff]
        %v200 = vld [vmem:[%s191 + $0x8] sm:$0xff]
        %v201 = vld [vmem:[%s191 + $0x10] sm:$0xff]
        %v202 = vld [vmem:[%s1] sm:$0xff]
        %v203 = vld [vmem:[%s1 + $0x8] sm:$0xff]
        %v204 = vld [vmem:[%s1 + $0x10] sm:$0xff]
        %v205 = vld [vmem:[%s1 + $0x18] sm:$0xff]
        %v206 = vld [vmem:[%s2] sm:$0xff]
        %v207 = vld [vmem:[%s2 + $0x8] sm:$0xff]
        %v208 = vld [vmem:[%s2 + $0x10] sm:$0xff]
        %v209 = vld [vmem:[%s2 + $0x18] sm:$0xff]
        %211 = vset.pattern.permute.xlu0 0
        %212 = vperm.xlu0 %211, %v206
        %v213 = vpop.permute.xlu0 %212
        %216 = vset.pattern.permute.xlu0 0
        %217 = vperm.xlu0 %216, %v207
        %v218 = vpop.permute.xlu0 %217
        %221 = vset.pattern.permute.xlu0 0
        %222 = vperm.xlu0 %221, %v208
        %v223 = vpop.permute.xlu0 %222
        %226 = vset.pattern.permute.xlu0 0
        %227 = vperm.xlu0 %226, %v209
        %v228 = vpop.permute.xlu0 %227
        %vm230 = vcmask 195584
        %v232 = vsel %vm230, %v202, 0
        %v235 = vsel %vm230, %v203, 0
        %v238 = vsel %vm230, %v204, 0
        %v241 = vsel %vm230, %v205, 0
        %243 = vmatprep.subr.mxu0 0.0
        %244 = vmatpush1.msra.mxu0 %v199
        %245 = vmatprep.subr.mxu0 0.0
        %246 = vmatpush1.msra.mxu0 %v200
        %247 = vmatprep.subr.mxu0 0.0
        %248 = vmatpush1.msra.mxu0 %v201
        %249 = vmatprep.subr.mxu0 0.0
        %250 = vmatpush1.msra.mxu0 0.0
        %251 = vmatprep.subr.mxu0 0.0
        %252 = vmatpush1.msra.mxu0 0.0
        %253 = vmatprep.subr.mxu0 0.0
        %254 = vmatpush1.msra.mxu0 0.0
        %255 = vmatprep.subr.mxu0 0.0
        %256 = vmatpush1.msra.mxu0 0.0
        %257 = vmatprep.subr.mxu0 0.0
        %258 = vmatpush1.msra.mxu0 0.0
        %259 = vmatprep.subr.mxu0 0.0
        %260 = vmatpush1.msra.mxu0 0.0
        %261 = vmatprep.subr.mxu0 0.0
        %262 = vmatpush1.msra.mxu0 0.0
        %263 = vmatprep.subr.mxu0 0.0
        %264 = vmatpush1.msra.mxu0 0.0
        %265 = vmatprep.subr.mxu0 0.0
        %266 = vmatpush1.msra.mxu0 0.0
        %267 = vmatprep.subr.mxu0 0.0
        %268 = vmatpush1.msra.mxu0 0.0
        %269 = vmatprep.subr.mxu0 0.0
        %270 = vmatpush1.msra.mxu0 0.0
        %271 = vmatprep.subr.mxu0 0.0
        %272 = vmatpush1.msra.mxu0 0.0
        %273 = vmatprep.subr.mxu0 0.0
        %274 = vmatpush1.msra.mxu0 0.0
        %275 = vmatprep.subr.mxu0 0.0
        %276 = vmatpush1.msra.mxu0 0.0
        %277 = vmatprep.subr.mxu0 0.0
        %278 = vmatpush1.msra.mxu0 0.0
        %279 = vmatprep.subr.mxu0 0.0
        %280 = vmatpush1.msra.mxu0 0.0
        %281 = vmatprep.subr.mxu0 0.0
        %282 = vmatpush1.msra.mxu0 0.0
        %283 = vmatprep.subr.mxu0 0.0
        %284 = vmatpush1.msra.mxu0 0.0
        %285 = vmatprep.subr.mxu0 0.0
        %286 = vmatpush1.msra.mxu0 0.0
        %287 = vmatprep.subr.mxu0 0.0
        %288 = vmatpush1.msra.mxu0 0.0
        %289 = vmatprep.subr.mxu0 0.0
        %290 = vmatpush1.msra.mxu0 0.0
        %291 = vmatprep.subr.mxu0 0.0
        %292 = vmatpush1.msra.mxu0 0.0
        %293 = vmatprep.subr.mxu0 0.0
        %294 = vmatpush1.msra.mxu0 0.0
        %295 = vmatprep.subr.mxu0 0.0
        %296 = vmatpush1.msra.mxu0 0.0
        %297 = vmatprep.subr.mxu0 0.0
        %298 = vmatpush1.msra.mxu0 0.0
        %299 = vmatprep.subr.mxu0 0.0
        %300 = vmatpush1.msra.mxu0 0.0
        %301 = vmatprep.subr.mxu0 0.0
        %302 = vmatpush1.msra.mxu0 0.0
        %303 = vmatprep.subr.mxu0 0.0
        %304 = vmatpush1.msra.mxu0 0.0
        %305 = vmatprep.subr.mxu0 0.0
        %306 = vmatpush1.msra.mxu0 0.0
        %307 = vmatprep.mubr.f32.mxu0 0.0
        %308 = vmatmul.mubr.f32.gmra.mrb[0].mxu0 %v232
        %v309 = vpop.f32.mrb[0].mxu0
        %v310 = vadd.f32 %v213, %v309
        %v311 = vpop.f32.mrb[0].mxu0
        %312 = vmatprep.mubr.f32.mxu0 0.0
        %313 = vmatmul.mubr.f32.gmra.mrb[0].mxu0 %v235
        %v314 = vpop.f32.mrb[0].mxu0
        %v315 = vadd.f32 %v218, %v314
        %v316 = vpop.f32.mrb[0].mxu0
        %317 = vmatprep.mubr.f32.mxu0 0.0
        %318 = vmatmul.mubr.f32.gmra.mrb[0].mxu0 %v238
        %v319 = vpop.f32.mrb[0].mxu0
        %v320 = vadd.f32 %v223, %v319
        %v321 = vpop.f32.mrb[0].mxu0
        %322 = vmatprep.mubr.f32.mxu0 0.0
        %323 = vmatmul.mubr.f32.gmra.mrb[0].mxu0 %v241
        %v324 = vpop.f32.mrb[0].mxu0
        %v325 = vadd.f32 %v228, %v324
        %v326 = vpop.f32.mrb[0].mxu0
        %327 = vdwg.mxu0
        %s328 = smul.u32 %s22, 128
        %v329 = vlaneseq
        %v330 = vand.u32 %v329, 127
        %v331 = vstv %s328
        %v332 = vadd.s32 %v331, %v330
        %vm333 = vcmp.lt.s32.totalorder %v332, 30
        %v334 = vsel %vm333, 1, 0
        %v335 = vcvt.s32.f32 %v334
        %v336 = vld [vmem:[#allocation2] sm:$0xff]
        %v337 = vld [vmem:[#allocation2 + $0x8] sm:$0xff]
        %v338 = vmul.f32 %v310, %v335
        %v339 = vmul.f32 %v315, %v335
        %340 = vmatprep.subr.mxu0 0.0
        %341 = vmatpush1.xpose.msra.mxu0 %v320
        %342 = vmatprep.subr.mxu0 0.0
        %343 = vmatpush1.xpose.msra.mxu0 %v325
        %344 = vmatprep.subr.mxu0 0.0
        %345 = vmatpush1.xpose.msra.mxu0 0.0
        %346 = vmatprep.subr.mxu0 0.0
        %347 = vmatpush1.xpose.msra.mxu0 0.0
        %348 = vmatprep.subr.mxu0 0.0
        %349 = vmatpush1.xpose.msra.mxu0 0.0
        %350 = vmatprep.subr.mxu0 0.0
        %351 = vmatpush1.xpose.msra.mxu0 0.0
        %352 = vmatprep.subr.mxu0 0.0
        %353 = vmatpush1.xpose.msra.mxu0 0.0
        %354 = vmatprep.subr.mxu0 0.0
        %355 = vmatpush1.xpose.msra.mxu0 0.0
        %356 = vmatprep.subr.mxu0 0.0
        %357 = vmatpush1.xpose.msra.mxu0 0.0
        %358 = vmatprep.subr.mxu0 0.0
        %359 = vmatpush1.xpose.msra.mxu0 0.0
        %360 = vmatprep.subr.mxu0 0.0
        %361 = vmatpush1.xpose.msra.mxu0 0.0
        %362 = vmatprep.subr.mxu0 0.0
        %363 = vmatpush1.xpose.msra.mxu0 0.0
        %364 = vmatprep.subr.mxu0 0.0
        %365 = vmatpush1.xpose.msra.mxu0 0.0
        %366 = vmatprep.subr.mxu0 0.0
        %367 = vmatpush1.xpose.msra.mxu0 0.0
        %368 = vmatprep.subr.mxu0 0.0
        %369 = vmatpush1.xpose.msra.mxu0 0.0
        %370 = vmatprep.subr.mxu0 0.0
        %371 = vmatpush1.xpose.msra.mxu0 0.0
        %372 = vmatprep.subr.mxu0 0.0
        %373 = vmatpush1.xpose.msra.mxu0 0.0
        %374 = vmatprep.subr.mxu0 0.0
        %375 = vmatpush1.xpose.msra.mxu0 0.0
        %376 = vmatprep.subr.mxu0 0.0
        %377 = vmatpush1.xpose.msra.mxu0 0.0
        %378 = vmatprep.subr.mxu0 0.0
        %379 = vmatpush1.xpose.msra.mxu0 0.0
        %380 = vmatprep.subr.mxu0 0.0
        %381 = vmatpush1.xpose.msra.mxu0 0.0
        %382 = vmatprep.subr.mxu0 0.0
        %383 = vmatpush1.xpose.msra.mxu0 0.0
        %384 = vmatprep.subr.mxu0 0.0
        %385 = vmatpush1.xpose.msra.mxu0 0.0
        %386 = vmatprep.subr.mxu0 0.0
        %387 = vmatpush1.xpose.msra.mxu0 0.0
        %388 = vmatprep.subr.mxu0 0.0
        %389 = vmatpush1.xpose.msra.mxu0 0.0
        %390 = vmatprep.subr.mxu0 0.0
        %391 = vmatpush1.xpose.msra.mxu0 0.0
        %392 = vmatprep.subr.mxu0 0.0
        %393 = vmatpush1.xpose.msra.mxu0 0.0
        %394 = vmatprep.subr.mxu0 0.0
        %395 = vmatpush1.xpose.msra.mxu0 0.0
        %396 = vmatprep.subr.mxu0 0.0
        %397 = vmatpush1.xpose.msra.mxu0 0.0
        %398 = vmatprep.subr.mxu0 0.0
        %399 = vmatpush1.xpose.msra.mxu0 0.0
        %400 = vmatprep.subr.mxu0 0.0
        %401 = vmatpush1.xpose.msra.mxu0 0.0
        %402 = vmatprep.subr.mxu0 0.0
        %403 = vmatpush1.xpose.msra.mxu0 0.0
        %404 = vmatprep.mubr.f32.mxu0 0.0
        %405 = vmatmul.mubr.f32.gmra.mrb[0].mxu0 %v338
        %v406 = vpop.f32.mrb[0].mxu0
        %v407 = vadd.f32 0.0, %v406
        %v408 = vpop.f32.mrb[0].mxu0
        %409 = vmatprep.mubr.f32.mxu0 0.0
        %410 = vmatmul.mubr.f32.gmra.mrb[0].mxu0 %v339
        %v411 = vpop.f32.mrb[0].mxu0
        %v412 = vadd.f32 0.0, %v411
        %v413 = vpop.f32.mrb[0].mxu0
        %414 = vdwg.mxu0
        %v415 = vadd.f32 %v336, %v407
        %v416 = vadd.f32 %v337, %v412
        %vm417 = vcmask 130048
        %418 = vst.msk [vmem:[#allocation2] sm:$0xff] %vm417, %v415
        %419 = vst.msk [vmem:[#allocation2 + $0x8] sm:$0xff] %vm417, %v416
        // Predicated region
        $region37: #{tpu_custom_call.1} parent=31 // pred_check
          %p420 = pneg %p192
        $region38: #{tpu_custom_call.1} parent=31 // pred_check_branch
          %422 = sbr.rel (%p420) target = $region40
        $region39: #{tpu_custom_call.1} parent=31 // pred_region
          %v423 = vld [vmem:[#allocation2] sm:$0xff]
          %v424 = vld [vmem:[#allocation2 + $0x8] sm:$0xff]
          %v425 = vmul.f32 %v423, 0.033333335
          %v426 = vmul.f32 %v424, 0.033333335
          %427 = vst.msk [vmem:[%s183] sm:$0xff] %vm417, %v425
          %428 = vst.msk [vmem:[%s183 + $0x8] sm:$0xff] %vm417, %v426
        $region40: #{tpu_custom_call.1} parent=31 // pred_fallthru
          _
        %s429 = sand.u32 %s107, 1
        %s430 = scalar_lea.sflag [#allocation4], %s429
        %s431 = sand.u32 %s107, 1
        %s432 = smul.addr %s431, 16
        %s433 = scalar_lea.vmem [#allocation3], %s432
        // Predicated region
        $region41: #{tpu_custom_call.1} parent=31 // pred_check
          %p434 = pneg %p117
        $region42: #{tpu_custom_call.1} parent=31 // pred_check_branch
          %436 = sbr.rel (%p434) target = $region44
        $region43: #{tpu_custom_call.1} parent=31 // pred_region
          %s438 = ssub.s32 256, 256
          %439 = vsyncadd %s430, %s438
          %s440 = smul.addr %s21, 2
          %s441 = smul.addr %s440, 128
          %s442 = scalar_lea.hbm %s3, %s441
          %s443 = sshll.u32 %s433, 4
          %s444 = int_to_ptr.vmem [resolvable:$true] %s443
          %449 = dma.vmem_to_hbm [thread:$0]  %s444, 256, %s442, %s430, 128, 128, 8
        $region44: #{tpu_custom_call.1} parent=31 // pred_fallthru
          _
      $region32: #{tpu_custom_call.1} parent=5 // pred_fallthru
        _
      %p450 = scmp.le.s32.totalorder 2, %s12
      // Predicated region
      $region45: #{tpu_custom_call.1} parent=5 // pred_check
        %p451 = pneg %p450
      $region46: #{tpu_custom_call.1} parent=5 // pred_check_branch
        %453 = sbr.rel (%p451) target = $region48
      $region47: #{tpu_custom_call.1} parent=5 // pred_region
        %s454 = ssub.s32 %s12, 2
        // Predicated region
        $region49: #{tpu_custom_call.1} parent=47 // pred_check
          %p455 = pneg %p123
        $region50: #{tpu_custom_call.1} parent=47 // pred_check_branch
          %457 = sbr.rel (%p455) target = $region52
        $region51: #{tpu_custom_call.1} parent=47 // pred_region
          %s458 = sand.u32 %s108, 1
          %s459 = scalar_lea.sflag [#allocation4], %s458
          %s460 = sand.u32 %s108, 1
          %s461 = smul.addr %s460, 16
          %s462 = scalar_lea.vmem [#allocation3], %s461
          %463 = dma.done %s459, 256
        $region52: #{tpu_custom_call.1} parent=47 // pred_fallthru
          _
      $region48: #{tpu_custom_call.1} parent=5 // pred_fallthru
        _
    $region6: #{tpu_custom_call.1} parent=1 // loop_footer
      %s16 = sadd.s32 1, %s12
    $region7: #{tpu_custom_call.1} parent=1 // loop_footer_branch
      %11 = sbr.rel target = $region3
    $region8: #{tpu_custom_call.1} parent=1 // loop_exit
      _
    %464 = vsyncpa [#allocation4], 1
    %s465 = scalar_lea.sflag [#allocation4], 1
    %466 = vsyncpa %s465, 1

</llo_original>
